<compile_context>
chip_gen: v6e
topology: v6e:2x2x1
jax: 0.10.0
libtpu: 0.0.40
codegen_flags: <defaults>
</compile_context>

<pallas_src>
import functools

import jax
import jax.numpy as jnp
from jax import lax
from jax.experimental import pallas as pl
from jax.experimental.pallas import tpu as pltpu

C, M, R = 16, 2, 3                                # module defaults
DIMS = [1, C * 4, C * 8, C * 8, C * 4, M * R]     # 1 -> 64 -> 128 -> 128 -> 64 -> 6
PAD_OUT = 8                                       # compact padded output width
SUB_ROWS = 256                                    # inner sub-tile (live-range boundary)


def _leaky_relu(x, negative_slope=0.2):
    return jnp.where(x > 0, x, negative_slope * x)


def _round_up(n, m):
    return ((n + m - 1) // m) * m


def _cdiv(a, b):
    return (a + b - 1) // b


def attention_net_kernel(x_ref,
                         w1_ref, b1_ref, w2_ref, b2_ref, w3_ref, b3_ref,
                         w4_ref, b4_ref, w5_ref, b5_ref,
                         o_ref):
    # x_ref: (TB, 1) batch tile; weights/biases are grid-invariant and fully
    # resident in VMEM (loads hoisted out of the sub-tile loop).
    tb = x_ref.shape[0]
    sub = SUB_ROWS if (tb % SUB_ROWS == 0 and tb > SUB_ROWS) else tb
    n_sub = tb // sub

    w1 = w1_ref[...]; b1 = b1_ref[...]            # (1, 64)   f32  -- VPU path (K == 1)
    w2 = w2_ref[...]; b2 = b2_ref[...]            # (64, 128) bf16 / (1, 128) f32
    w3 = w3_ref[...]; b3 = b3_ref[...]            # (128, 128) bf16
    w4 = w4_ref[...]; b4 = b4_ref[...]            # (128, 64)  bf16
    w5 = w5_ref[...]; b5 = b5_ref[...]            # (64, 8)    bf16 / (1, 8) f32 (-1e30 pads)

    def compute(rows_x):
        # fc1: K == 1 -> broadcast multiply on the VPU (no MXU pass).
        h = _leaky_relu(rows_x * w1 + b1)                               # (sub, 64)
        # fc2..fc4: bf16 MXU operands, f32 accumulation, f32 activation math.
        h = _leaky_relu(jnp.dot(h.astype(jnp.bfloat16), w2,
                                preferred_element_type=jnp.float32) + b2)
        h = _leaky_relu(jnp.dot(h.astype(jnp.bfloat16), w3,
                                preferred_element_type=jnp.float32) + b3)
        h = _leaky_relu(jnp.dot(h.astype(jnp.bfloat16), w4,
                                preferred_element_type=jnp.float32) + b4)
        # fc5 (8-wide padded logits) + exact softmax in f32.
        logits = jnp.dot(h.astype(jnp.bfloat16), w5,
                         preferred_element_type=jnp.float32) + b5       # (sub, 8)
        mx = jnp.max(logits, axis=-1, keepdims=True)
        e = jnp.exp(logits - mx)
        return e / jnp.sum(e, axis=-1, keepdims=True)

    if n_sub == 1:
        o_ref[...] = compute(x_ref[...].astype(jnp.float32)).astype(o_ref.dtype)
    else:
        # Sub-tile the batch tile so activations stay register-resident
        # between layers; unroll=2 avoids vreg spills at large n_sub.
        def body(s, carry):
            i = pl.multiple_of(s * sub, sub)
            rows = x_ref[pl.ds(i, sub), :].astype(jnp.float32)
            o_ref[pl.ds(i, sub), :] = compute(rows).astype(o_ref.dtype)
            return carry
        lax.fori_loop(0, n_sub, body, 0, unroll=2)


def _prep_params(params):
    """Cast MXU weights to bf16 and pad fc5 to the compact PAD_OUT width."""
    (w1, b1), (w2, b2), (w3, b3), (w4, b4), (w5, b5) = params
    out_dim = w5.shape[1]
    w5p = jnp.zeros((w5.shape[0], PAD_OUT), jnp.float32).at[:, :out_dim].set(w5)
    # Padded logits get a huge negative bias so softmax assigns them 0 weight.
    b5p = jnp.full((1, PAD_OUT), -1e30, jnp.float32).at[:, :out_dim].set(b5)
    return [
        (w1.astype(jnp.float32),  b1.astype(jnp.float32)),   # fc1 stays f32 (VPU)
        (w2.astype(jnp.bfloat16), b2.astype(jnp.float32)),
        (w3.astype(jnp.bfloat16), b3.astype(jnp.float32)),
        (w4.astype(jnp.bfloat16), b4.astype(jnp.float32)),
        (w5p.astype(jnp.bfloat16), b5p.astype(jnp.float32)),
    ]


@functools.partial(jax.jit, static_argnames=("tb",))
def attention_net_forward(x, params, tb=2048):
    """x: (N, 1) float32. params: list of (W, b) with W (in, out), b (1, out)."""
    N = x.shape[0]
    out_dim = params[-1][0].shape[1]
    prepped = _prep_params(params)

    # ---- batch tiling (pad instead of asserting divisibility) --------------
    tb = max(SUB_ROWS, (tb // SUB_ROWS) * SUB_ROWS)   # tile = multiple of SUB_ROWS
    n8 = _round_up(max(N, 1), 8)                      # sublane-aligned batch
    if n8 <= SUB_ROWS:
        steps = 1
        tb_eff = _round_up(n8, 8)                     # tiny batch: one small tile
    else:
        steps = _cdiv(n8, tb)
        if steps > 1 and steps % 2 == 1:
            steps += 1            # even step count keeps both v7x TCs busy
        tb_eff = _round_up(_cdiv(n8, steps), SUB_ROWS)
    n_pad = steps * tb_eff

    x_pad = jnp.zeros((n_pad, 1), jnp.float32).at[:N, :].set(x.astype(jnp.float32))

    flat_params = []
    in_specs = [pl.BlockSpec((tb_eff, 1), lambda i: (i, 0))]   # x: tile the batch
    for (w, b) in prepped:
        flat_params += [w, b]
        # Grid-invariant full-array blocks (weights stay resident in VMEM).
        in_specs.append(pl.BlockSpec(w.shape, lambda i: (0, 0)))
        in_specs.append(pl.BlockSpec(b.shape, lambda i: (0, 0)))

    out = pl.pallas_call(
        attention_net_kernel,
        out_shape=jax.ShapeDtypeStruct((n_pad, PAD_OUT), jnp.float32),
        grid_spec=pltpu.PrefetchScalarGridSpec(
            num_scalar_prefetch=0,
            grid=(steps,),
            in_specs=in_specs,
            out_specs=pl.BlockSpec((tb_eff, PAD_OUT), lambda i: (i, 0)),
        ),
        compiler_params=pltpu.CompilerParams(
            dimension_semantics=("parallel",)),
    )(x_pad, *flat_params)

    # Near-free now that the stored row is only PAD_OUT (=8) f32 wide.
    return out[:N, :out_dim]


def init_params(key):
    """Deterministic init mimicking nn.Linear default (uniform +-1/sqrt(fan_in))."""
    params = []
    for idx in range(len(DIMS) - 1):
        fan_in, fan_out = DIMS[idx], DIMS[idx + 1]
        key, kw, kb = jax.random.split(key, 3)
        bound = 1.0 / (fan_in ** 0.5)
        w = jax.random.uniform(kw, (fan_in, fan_out), jnp.float32, -bound, bound)
        b = jax.random.uniform(kb, (1, fan_out), jnp.float32, -bound, bound)
        params.append((w, b))
    return params


def reference_forward(x, params):
    """Pure-JAX f32 reference matching the PyTorch module semantics."""
    h = x
    for (w, b) in params[:-1]:
        h = _leaky_relu(h @ w + b, 0.2)
    w, b = params[-1]
    return jax.nn.softmax(h @ w + b, axis=-1)


if __name__ == "__main__":
    key = jax.random.PRNGKey(0)
    params = init_params(key)

    def check(N):
        # time sequence input, (N, 1): e.g. [0, 1/(N-1), ..., 1]
        x = jnp.linspace(0.0, 1.0, N, dtype=jnp.float32).reshape(N, 1)
        out = jax.block_until_ready(attention_net_forward(x, params))
        ref = reference_forward(x, params)
        assert out.shape == (N, M * R)
        # bf16 MXU operands -> relaxed tolerances vs the f32 reference
        # (outputs are probabilities in [0, 1]).
        assert jnp.allclose(out, ref, atol=3e-2, rtol=3e-2), f"mismatch vs reference (N={N})"
        assert jnp.allclose(jnp.sum(out, axis=-1), 1.0, atol=1e-3), f"rows must sum to 1 (N={N})"

    check(8)      # tiny demo batch (single small tile, grid of 1)
    check(1000)   # exercises batch padding and the inner 256-row sub-tiling

    print("KERNEL_OK")
</pallas_src>

<mosaic_0001>
module attributes {stable_mosaic.version = 11 : i64} {
  func.func @attention_net_kernel(%arg0: i32, %arg1: memref<8x1xf32, #tpu.memory_space<vmem>>, %arg2: memref<1x64xf32, #tpu.memory_space<vmem>>, %arg3: memref<1x64xf32, #tpu.memory_space<vmem>>, %arg4: memref<64x128xbf16, #tpu.memory_space<vmem>>, %arg5: memref<1x128xf32, #tpu.memory_space<vmem>>, %arg6: memref<128x128xbf16, #tpu.memory_space<vmem>>, %arg7: memref<1x128xf32, #tpu.memory_space<vmem>>, %arg8: memref<128x64xbf16, #tpu.memory_space<vmem>>, %arg9: memref<1x64xf32, #tpu.memory_space<vmem>>, %arg10: memref<64x8xbf16, #tpu.memory_space<vmem>>, %arg11: memref<1x8xf32, #tpu.memory_space<vmem>>, %arg12: memref<8x8xf32, #tpu.memory_space<vmem>>) attributes {dimension_semantics = [#tpu.dimension_semantics<parallel>], iteration_bounds = array<i64: 1>, scalar_prefetch = 0 : i64, scratch_operands = 0 : i64, tpu.core_type = #tpu.core_type<tc>, window_params = [{transform_indices = @transform_0, window_bounds = array<i64: 8, 1>}, {pipeline_mode = #tpu.pipeline_mode<synchronous>, transform_indices = @transform_1, window_bounds = array<i64: 1, 64>}, {pipeline_mode = #tpu.pipeline_mode<synchronous>, transform_indices = @transform_2, window_bounds = array<i64: 1, 64>}, {pipeline_mode = #tpu.pipeline_mode<synchronous>, transform_indices = @transform_3, window_bounds = array<i64: 64, 128>}, {pipeline_mode = #tpu.pipeline_mode<synchronous>, transform_indices = @transform_4, window_bounds = array<i64: 1, 128>}, {pipeline_mode = #tpu.pipeline_mode<synchronous>, transform_indices = @transform_5, window_bounds = array<i64: 128, 128>}, {pipeline_mode = #tpu.pipeline_mode<synchronous>, transform_indices = @transform_6, window_bounds = array<i64: 1, 128>}, {pipeline_mode = #tpu.pipeline_mode<synchronous>, transform_indices = @transform_7, window_bounds = array<i64: 128, 64>}, {pipeline_mode = #tpu.pipeline_mode<synchronous>, transform_indices = @transform_8, window_bounds = array<i64: 1, 64>}, {pipeline_mode = #tpu.pipeline_mode<synchronous>, transform_indices = @transform_9, window_bounds = array<i64: 64, 8>}, {pipeline_mode = #tpu.pipeline_mode<synchronous>, transform_indices = @transform_10, window_bounds = array<i64: 1, 8>}, {transform_indices = @transform_11, window_bounds = array<i64: 8, 8>}]} {
    %c0 = arith.constant 0 : index
    %c0_0 = arith.constant 0 : index
    %0 = vector.load %arg2[%c0, %c0_0] : memref<1x64xf32, #tpu.memory_space<vmem>>, vector<1x64xf32>
    %c0_1 = arith.constant 0 : index
    %c0_2 = arith.constant 0 : index
    %1 = vector.load %arg3[%c0_1, %c0_2] : memref<1x64xf32, #tpu.memory_space<vmem>>, vector<1x64xf32>
    %c0_3 = arith.constant 0 : index
    %c0_4 = arith.constant 0 : index
    %2 = vector.load %arg4[%c0_3, %c0_4] : memref<64x128xbf16, #tpu.memory_space<vmem>>, vector<64x128xbf16>
    %c0_5 = arith.constant 0 : index
    %c0_6 = arith.constant 0 : index
    %3 = vector.load %arg5[%c0_5, %c0_6] : memref<1x128xf32, #tpu.memory_space<vmem>>, vector<1x128xf32>
    %c0_7 = arith.constant 0 : index
    %c0_8 = arith.constant 0 : index
    %4 = vector.load %arg6[%c0_7, %c0_8] : memref<128x128xbf16, #tpu.memory_space<vmem>>, vector<128x128xbf16>
    %c0_9 = arith.constant 0 : index
    %c0_10 = arith.constant 0 : index
    %5 = vector.load %arg7[%c0_9, %c0_10] : memref<1x128xf32, #tpu.memory_space<vmem>>, vector<1x128xf32>
    %c0_11 = arith.constant 0 : index
    %c0_12 = arith.constant 0 : index
    %6 = vector.load %arg8[%c0_11, %c0_12] : memref<128x64xbf16, #tpu.memory_space<vmem>>, vector<128x64xbf16>
    %c0_13 = arith.constant 0 : index
    %c0_14 = arith.constant 0 : index
    %7 = vector.load %arg9[%c0_13, %c0_14] : memref<1x64xf32, #tpu.memory_space<vmem>>, vector<1x64xf32>
    %c0_15 = arith.constant 0 : index
    %c0_16 = arith.constant 0 : index
    %8 = vector.load %arg10[%c0_15, %c0_16] : memref<64x8xbf16, #tpu.memory_space<vmem>>, vector<64x8xbf16>
    %c0_17 = arith.constant 0 : index
    %c0_18 = arith.constant 0 : index
    %9 = vector.load %arg11[%c0_17, %c0_18] : memref<1x8xf32, #tpu.memory_space<vmem>>, vector<1x8xf32>
    %c0_19 = arith.constant 0 : index
    %c0_20 = arith.constant 0 : index
    %10 = vector.load %arg1[%c0_19, %c0_20] : memref<8x1xf32, #tpu.memory_space<vmem>>, vector<8x1xf32>
    %11 = vector.broadcast %10 : vector<8x1xf32> to vector<8x64xf32>
    %12 = vector.broadcast %0 : vector<1x64xf32> to vector<8x64xf32>
    %13 = arith.mulf %11, %12 : vector<8x64xf32>
    %14 = vector.broadcast %1 : vector<1x64xf32> to vector<8x64xf32>
    %15 = arith.addf %13, %14 : vector<8x64xf32>
    %cst = arith.constant 0.000000e+00 : f32
    %16 = vector.broadcast %cst : f32 to vector<8x64xf32>
    %17 = arith.cmpf ogt, %15, %16 : vector<8x64xf32>
    %cst_21 = arith.constant 2.000000e-01 : f32
    %18 = vector.broadcast %cst_21 : f32 to vector<8x64xf32>
    %19 = arith.mulf %18, %15 : vector<8x64xf32>
    %20 = arith.select %17, %15, %19 : vector<8x64xi1>, vector<8x64xf32>
    %21 = arith.truncf %20 : vector<8x64xf32> to vector<8x64xbf16>
    %cst_22 = arith.constant dense<0.000000e+00> : vector<8x128xf32>
    %22 = tpu.matmul %21, %2, %cst_22 {dimension_numbers = #tpu.dot_dimension_numbers<[1], [0], [0], [1], [0, 0, 1, 1], [], []>} : vector<8x64xbf16>, vector<64x128xbf16>, vector<8x128xf32> -> vector<8x128xf32>
    %23 = vector.broadcast %3 : vector<1x128xf32> to vector<8x128xf32>
    %24 = arith.addf %22, %23 : vector<8x128xf32>
    %cst_23 = arith.constant 0.000000e+00 : f32
    %25 = vector.broadcast %cst_23 : f32 to vector<8x128xf32>
    %26 = arith.cmpf ogt, %24, %25 : vector<8x128xf32>
    %cst_24 = arith.constant 2.000000e-01 : f32
    %27 = vector.broadcast %cst_24 : f32 to vector<8x128xf32>
    %28 = arith.mulf %27, %24 : vector<8x128xf32>
    %29 = arith.select %26, %24, %28 : vector<8x128xi1>, vector<8x128xf32>
    %30 = arith.truncf %29 : vector<8x128xf32> to vector<8x128xbf16>
    %cst_25 = arith.constant dense<0.000000e+00> : vector<8x128xf32>
    %31 = tpu.matmul %30, %4, %cst_25 {dimension_numbers = #tpu.dot_dimension_numbers<[1], [0], [0], [1], [0, 0, 1, 1], [], []>} : vector<8x128xbf16>, vector<128x128xbf16>, vector<8x128xf32> -> vector<8x128xf32>
    %32 = vector.broadcast %5 : vector<1x128xf32> to vector<8x128xf32>
    %33 = arith.addf %31, %32 : vector<8x128xf32>
    %cst_26 = arith.constant 0.000000e+00 : f32
    %34 = vector.broadcast %cst_26 : f32 to vector<8x128xf32>
    %35 = arith.cmpf ogt, %33, %34 : vector<8x128xf32>
    %cst_27 = arith.constant 2.000000e-01 : f32
    %36 = vector.broadcast %cst_27 : f32 to vector<8x128xf32>
    %37 = arith.mulf %36, %33 : vector<8x128xf32>
    %38 = arith.select %35, %33, %37 : vector<8x128xi1>, vector<8x128xf32>
    %39 = arith.truncf %38 : vector<8x128xf32> to vector<8x128xbf16>
    %cst_28 = arith.constant dense<0.000000e+00> : vector<8x64xf32>
    %40 = tpu.matmul %39, %6, %cst_28 {dimension_numbers = #tpu.dot_dimension_numbers<[1], [0], [0], [1], [0, 0, 1, 1], [], []>} : vector<8x128xbf16>, vector<128x64xbf16>, vector<8x64xf32> -> vector<8x64xf32>
    %41 = vector.broadcast %7 : vector<1x64xf32> to vector<8x64xf32>
    %42 = arith.addf %40, %41 : vector<8x64xf32>
    %cst_29 = arith.constant 0.000000e+00 : f32
    %43 = vector.broadcast %cst_29 : f32 to vector<8x64xf32>
    %44 = arith.cmpf ogt, %42, %43 : vector<8x64xf32>
    %cst_30 = arith.constant 2.000000e-01 : f32
    %45 = vector.broadcast %cst_30 : f32 to vector<8x64xf32>
    %46 = arith.mulf %45, %42 : vector<8x64xf32>
    %47 = arith.select %44, %42, %46 : vector<8x64xi1>, vector<8x64xf32>
    %48 = arith.truncf %47 : vector<8x64xf32> to vector<8x64xbf16>
    %cst_31 = arith.constant dense<0.000000e+00> : vector<8x8xf32>
    %49 = tpu.matmul %48, %8, %cst_31 {dimension_numbers = #tpu.dot_dimension_numbers<[1], [0], [0], [1], [0, 0, 1, 1], [], []>} : vector<8x64xbf16>, vector<64x8xbf16>, vector<8x8xf32> -> vector<8x8xf32>
    %50 = vector.broadcast %9 : vector<1x8xf32> to vector<8x8xf32>
    %51 = arith.addf %49, %50 : vector<8x8xf32>
    %cst_32 = arith.constant dense<0xFF800000> : vector<8xf32>
    %52 = vector.multi_reduction <maximumf>, %51, %cst_32 [1] : vector<8x8xf32> to vector<8xf32>
    %53 = vector.shape_cast %52 : vector<8xf32> to vector<8x1xf32>
    %54 = vector.broadcast %53 : vector<8x1xf32> to vector<8x8xf32>
    %55 = arith.subf %51, %54 : vector<8x8xf32>
    %56 = math.exp %55 : vector<8x8xf32>
    %cst_33 = arith.constant dense<0.000000e+00> : vector<8xf32>
    %57 = vector.multi_reduction <add>, %56, %cst_33 [1] : vector<8x8xf32> to vector<8xf32>
    %58 = vector.shape_cast %57 : vector<8xf32> to vector<8x1xf32>
    %59 = vector.broadcast %58 : vector<8x1xf32> to vector<8x8xf32>
    %60 = arith.divf %56, %59 : vector<8x8xf32>
    %c0_34 = arith.constant 0 : index
    %c0_35 = arith.constant 0 : index
    %61 = vector.load %arg12[%c0_34, %c0_35] : memref<8x8xf32, #tpu.memory_space<vmem>>, vector<8x8xf32>
    tpu.vector_store %arg12[%c0_34, %c0_35], %60 {strides = array<i32>} : memref<8x8xf32, #tpu.memory_space<vmem>>, vector<8x8xf32>,
    return
  }
  func.func @transform_0(%arg0: i32) -> (i32, i32) {
    %c0_i32 = arith.constant 0 : i32
    %c0_i32_0 = arith.constant 0 : i32
    return %arg0, %c0_i32 : i32, i32
  }
  func.func @transform_1(%arg0: i32) -> (i32, i32) {
    %c0_i32 = arith.constant 0 : i32
    %c0_i32_0 = arith.constant 0 : i32
    %c0_i32_1 = arith.constant 0 : i32
    return %c0_i32, %c0_i32_0 : i32, i32
  }
  func.func @transform_2(%arg0: i32) -> (i32, i32) {
    %c0_i32 = arith.constant 0 : i32
    %c0_i32_0 = arith.constant 0 : i32
    %c0_i32_1 = arith.constant 0 : i32
    return %c0_i32, %c0_i32_0 : i32, i32
  }
  func.func @transform_3(%arg0: i32) -> (i32, i32) {
    %c0_i32 = arith.constant 0 : i32
    %c0_i32_0 = arith.constant 0 : i32
    %c0_i32_1 = arith.constant 0 : i32
    return %c0_i32, %c0_i32_0 : i32, i32
  }
  func.func @transform_4(%arg0: i32) -> (i32, i32) {
    %c0_i32 = arith.constant 0 : i32
    %c0_i32_0 = arith.constant 0 : i32
    %c0_i32_1 = arith.constant 0 : i32
    return %c0_i32, %c0_i32_0 : i32, i32
  }
  func.func @transform_5(%arg0: i32) -> (i32, i32) {
    %c0_i32 = arith.constant 0 : i32
    %c0_i32_0 = arith.constant 0 : i32
    %c0_i32_1 = arith.constant 0 : i32
    return %c0_i32, %c0_i32_0 : i32, i32
  }
  func.func @transform_6(%arg0: i32) -> (i32, i32) {
    %c0_i32 = arith.constant 0 : i32
    %c0_i32_0 = arith.constant 0 : i32
    %c0_i32_1 = arith.constant 0 : i32
    return %c0_i32, %c0_i32_0 : i32, i32
  }
  func.func @transform_7(%arg0: i32) -> (i32, i32) {
    %c0_i32 = arith.constant 0 : i32
    %c0_i32_0 = arith.constant 0 : i32
    %c0_i32_1 = arith.constant 0 : i32
    return %c0_i32, %c0_i32_0 : i32, i32
  }
  func.func @transform_8(%arg0: i32) -> (i32, i32) {
    %c0_i32 = arith.constant 0 : i32
    %c0_i32_0 = arith.constant 0 : i32
    %c0_i32_1 = arith.constant 0 : i32
    return %c0_i32, %c0_i32_0 : i32, i32
  }
  func.func @transform_9(%arg0: i32) -> (i32, i32) {
    %c0_i32 = arith.constant 0 : i32
    %c0_i32_0 = arith.constant 0 : i32
    %c0_i32_1 = arith.constant 0 : i32
    return %c0_i32, %c0_i32_0 : i32, i32
  }
  func.func @transform_10(%arg0: i32) -> (i32, i32) {
    %c0_i32 = arith.constant 0 : i32
    %c0_i32_0 = arith.constant 0 : i32
    %c0_i32_1 = arith.constant 0 : i32
    return %c0_i32, %c0_i32_0 : i32, i32
  }
  func.func @transform_11(%arg0: i32) -> (i32, i32) {
    %c0_i32 = arith.constant 0 : i32
    %c0_i32_0 = arith.constant 0 : i32
    return %arg0, %c0_i32 : i32, i32
  }
}

</mosaic_0001>

<llo_original>
// kernel: attention_net_forward.1
$region0: #{attention_net_forward.1}
  #allocation0 [shape = 'u32[]', space=smem, size = 0x4, offset = 0x4, fixed_abs, tag = 'smem constant byte address 0x4 - core index']
  #allocation1 [shape = 'u32[144,128]{1,0:T(1,128)}', space=vmem, size = 0x12000, scoped, tag = 'internal scratch']
  %s0 = inlined_call_operand.vmem [shape: f32[8,1], index: 0, kind: input, shape index: {}]
  %s1 = inlined_call_operand.vmem [shape: f32[1,64], index: 1, kind: input, shape index: {}]
  %s2 = inlined_call_operand.vmem [shape: f32[1,64], index: 2, kind: input, shape index: {}]
  %s3 = inlined_call_operand.vmem [shape: bf16[64,128], index: 3, kind: input, shape index: {}]
  %s4 = inlined_call_operand.vmem [shape: f32[1,128], index: 4, kind: input, shape index: {}]
  %s5 = inlined_call_operand.vmem [shape: bf16[128,128], index: 5, kind: input, shape index: {}]
  %s6 = inlined_call_operand.vmem [shape: f32[1,128], index: 6, kind: input, shape index: {}]
  %s7 = inlined_call_operand.vmem [shape: bf16[128,64], index: 7, kind: input, shape index: {}]
  %s8 = inlined_call_operand.vmem [shape: f32[1,64], index: 8, kind: input, shape index: {}]
  %s9 = inlined_call_operand.vmem [shape: bf16[64,8], index: 9, kind: input, shape index: {}]
  %s10 = inlined_call_operand.vmem [shape: f32[1,8], index: 10, kind: input, shape index: {}]
  %s11 = inlined_call_operand.hbm [shape: f32[8,8], index: 11, kind: output, shape index: {}]
  %s12 = sld [smem:[#allocation0]]
  $region54: #{attention_net_forward.1} parent=0
    _
  %s14 = ssub.s32 1, %s12
  %s15 = scalar_select 0, %s14, %s12
  $region1: #{attention_net_forward.1} parent=0
    #allocation2 [shape = 'u8[4096]{0}', space=vmem, size = 0x1000, scoped, tag = 'output window, operand 0, single buffered']
    #allocation3 [shape = 's32[1]{0}', space=sflag, size = 0x4, scoped, tag = 'scoped memory for attention_net_forward.1']
    %16 = vsyncpa [#allocation3], 0
    // Predicated region
    $region2: #{attention_net_forward.1} parent=1 // pred_check
      _
    $region3: #{attention_net_forward.1} parent=1 // pred_check_branch
      %18 = sbr.rel (0) target = $region5
    $region4: #{attention_net_forward.1} parent=1 // pred_region
      _
    $region5: #{attention_net_forward.1} parent=1 // pred_fallthru
      _
    // Predicated region
    $region6: #{attention_net_forward.1} parent=1 // pred_check
      _
    $region7: #{attention_net_forward.1} parent=1 // pred_check_branch
      %20 = sbr.rel (0) target = $region9
    $region8: #{attention_net_forward.1} parent=1 // pred_region
      _
    $region9: #{attention_net_forward.1} parent=1 // pred_fallthru
      _
    // Predicated region
    $region10: #{attention_net_forward.1} parent=1 // pred_check
      _
    $region11: #{attention_net_forward.1} parent=1 // pred_check_branch
      %22 = sbr.rel (0) target = $region13
    $region12: #{attention_net_forward.1} parent=1 // pred_region
      _
    $region13: #{attention_net_forward.1} parent=1 // pred_fallthru
      _
    // Predicated region
    $region14: #{attention_net_forward.1} parent=1 // pred_check
      _
    $region15: #{attention_net_forward.1} parent=1 // pred_check_branch
      %24 = sbr.rel (0) target = $region17
    $region16: #{attention_net_forward.1} parent=1 // pred_region
      _
    $region17: #{attention_net_forward.1} parent=1 // pred_fallthru
      _
    // Predicated region
    $region18: #{attention_net_forward.1} parent=1 // pred_check
      _
    $region19: #{attention_net_forward.1} parent=1 // pred_check_branch
      %26 = sbr.rel (0) target = $region21
    $region20: #{attention_net_forward.1} parent=1 // pred_region
      _
    $region21: #{attention_net_forward.1} parent=1 // pred_fallthru
      _
    // Predicated region
    $region22: #{attention_net_forward.1} parent=1 // pred_check
      _
    $region23: #{attention_net_forward.1} parent=1 // pred_check_branch
      %28 = sbr.rel (0) target = $region25
    $region24: #{attention_net_forward.1} parent=1 // pred_region
      _
    $region25: #{attention_net_forward.1} parent=1 // pred_fallthru
      _
    // Predicated region
    $region26: #{attention_net_forward.1} parent=1 // pred_check
      _
    $region27: #{attention_net_forward.1} parent=1 // pred_check_branch
      %30 = sbr.rel (0) target = $region29
    $region28: #{attention_net_forward.1} parent=1 // pred_region
      _
    $region29: #{attention_net_forward.1} parent=1 // pred_fallthru
      _
    // Predicated region
    $region30: #{attention_net_forward.1} parent=1 // pred_check
      _
    $region31: #{attention_net_forward.1} parent=1 // pred_check_branch
      %32 = sbr.rel (0) target = $region33
    $region32: #{attention_net_forward.1} parent=1 // pred_region
      _
    $region33: #{attention_net_forward.1} parent=1 // pred_fallthru
      _
    // Predicated region
    $region34: #{attention_net_forward.1} parent=1 // pred_check
      _
    $region35: #{attention_net_forward.1} parent=1 // pred_check_branch
      %34 = sbr.rel (0) target = $region37
    $region36: #{attention_net_forward.1} parent=1 // pred_region
      _
    $region37: #{attention_net_forward.1} parent=1 // pred_fallthru
      _
    // Predicated region
    $region38: #{attention_net_forward.1} parent=1 // pred_check
      _
    $region39: #{attention_net_forward.1} parent=1 // pred_check_branch
      %36 = sbr.rel (0) target = $region41
    $region40: #{attention_net_forward.1} parent=1 // pred_region
      _
    $region41: #{attention_net_forward.1} parent=1 // pred_fallthru
      _
    // Predicated region
    $region42: #{attention_net_forward.1} parent=1 // pred_check
      _
    $region43: #{attention_net_forward.1} parent=1 // pred_check_branch
      %38 = sbr.rel (0) target = $region45
    $region44: #{attention_net_forward.1} parent=1 // pred_region
      _
    $region45: #{attention_net_forward.1} parent=1 // pred_fallthru
      _
    %v40 = vld [vmem:[%s1] sm:$0x1]
    %v41 = vld [vmem:[%s2] sm:$0x1]
    %v42 = vld [vmem:[%s3] sm:$0xf]
    %v43 = vld [vmem:[%s3 + $0x4] sm:$0xf]
    %v44 = vld [vmem:[%s3 + $0x8] sm:$0xf]
    %v45 = vld [vmem:[%s3 + $0xc] sm:$0xf]
    %v46 = vld [vmem:[%s3 + $0x10] sm:$0xf]
    %v47 = vld [vmem:[%s3 + $0x14] sm:$0xf]
    %v48 = vld [vmem:[%s3 + $0x18] sm:$0xf]
    %v49 = vld [vmem:[%s3 + $0x1c] sm:$0xf]
    %v50 = vld [vmem:[%s4] sm:$0x1]
    %v51 = vld [vmem:[%s5] sm:$0xf]
    %v52 = vld [vmem:[%s5 + $0x4] sm:$0xf]
    %v53 = vld [vmem:[%s5 + $0x8] sm:$0xf]
    %v54 = vld [vmem:[%s5 + $0xc] sm:$0xf]
    %v55 = vld [vmem:[%s5 + $0x10] sm:$0xf]
    %v56 = vld [vmem:[%s5 + $0x14] sm:$0xf]
    %v57 = vld [vmem:[%s5 + $0x18] sm:$0xf]
    %v58 = vld [vmem:[%s5 + $0x1c] sm:$0xf]
    %v59 = vld [vmem:[%s5 + $0x20] sm:$0xf]
    %v60 = vld [vmem:[%s5 + $0x24] sm:$0xf]
    %v61 = vld [vmem:[%s5 + $0x28] sm:$0xf]
    %v62 = vld [vmem:[%s5 + $0x2c] sm:$0xf]
    %v63 = vld [vmem:[%s5 + $0x30] sm:$0xf]
    %v64 = vld [vmem:[%s5 + $0x34] sm:$0xf]
    %v65 = vld [vmem:[%s5 + $0x38] sm:$0xf]
    %v66 = vld [vmem:[%s5 + $0x3c] sm:$0xf]
    %v67 = vld [vmem:[%s6] sm:$0x1]
    %v68 = vld [vmem:[%s7] sm:$0xf]
    %v69 = vld [vmem:[%s7 + $0x4] sm:$0xf]
    %v70 = vld [vmem:[%s7 + $0x8] sm:$0xf]
    %v71 = vld [vmem:[%s7 + $0xc] sm:$0xf]
    %v72 = vld [vmem:[%s7 + $0x10] sm:$0xf]
    %v73 = vld [vmem:[%s7 + $0x14] sm:$0xf]
    %v74 = vld [vmem:[%s7 + $0x18] sm:$0xf]
    %v75 = vld [vmem:[%s7 + $0x1c] sm:$0xf]
    %v76 = vld [vmem:[%s7 + $0x20] sm:$0xf]
    %v77 = vld [vmem:[%s7 + $0x24] sm:$0xf]
    %v78 = vld [vmem:[%s7 + $0x28] sm:$0xf]
    %v79 = vld [vmem:[%s7 + $0x2c] sm:$0xf]
    %v80 = vld [vmem:[%s7 + $0x30] sm:$0xf]
    %v81 = vld [vmem:[%s7 + $0x34] sm:$0xf]
    %v82 = vld [vmem:[%s7 + $0x38] sm:$0xf]
    %v83 = vld [vmem:[%s7 + $0x3c] sm:$0xf]
    %v84 = vld [vmem:[%s8] sm:$0x1]
    %v85 = vld [vmem:[%s9] sm:$0xf]
    %v86 = vld [vmem:[%s9 + $0x4] sm:$0xf]
    %v87 = vld [vmem:[%s9 + $0x8] sm:$0xf]
    %v88 = vld [vmem:[%s9 + $0xc] sm:$0xf]
    %v89 = vld [vmem:[%s9 + $0x10] sm:$0xf]
    %v90 = vld [vmem:[%s9 + $0x14] sm:$0xf]
    %v91 = vld [vmem:[%s9 + $0x18] sm:$0xf]
    %v92 = vld [vmem:[%s9 + $0x1c] sm:$0xf]
    %v93 = vld [vmem:[%s10] sm:$0x1]
    %v94 = vld [vmem:[%s0] sm:$0xff]
    %96 = vset.pattern.permute.xlu0 0
    %97 = vperm.xlu0 %96, %v94
    %v98 = vpop.permute.xlu0 %97
    %v101 = vlaneseq
    %v102 = vshrl.u32 %v101, 7
    %v103 = vsub.s32 0, %v102
    %v104 = vrot.slane %v40, %v103
    %v106 = vmul.f32 %v98, %v104
    %v108 = vlaneseq
    %v109 = vshrl.u32 %v108, 7
    %v110 = vsub.s32 0, %v109
    %v111 = vrot.slane %v41, %v110
    %v113 = vadd.f32 %v106, %v111
    %vm114 = vcmp.gt.f32.partialorder %v113, 0.0
    %v115 = vmul.f32 %v113, 0.2
    %v116 = vsel %vm114, %v113, %v115
    %v117 = vpack.c.bf16 %v116, %v116
    %v119 = vlaneseq
    %v120 = vshrl.u32 %v119, 7
    %v121 = vsub.s32 0, %v120
    %v122 = vrot.slane %v50, %v121
    %v132 = vunpack.c.l.b16 %v42
    %v133 = vunpack.c.l.b16 %v43
    %v134 = vunpack.c.l.b16 %v44
    %v135 = vunpack.c.l.b16 %v45
    %v136 = vunpack.c.l.b16 %v46
    %v137 = vunpack.c.l.b16 %v47
    %v138 = vunpack.c.l.b16 %v48
    %v139 = vunpack.c.l.b16 %v49
    %v140 = vpack.c.b16 %v133, %v132
    %v141 = vpack.c.b16 %v135, %v134
    %v142 = vpack.c.b16 %v137, %v136
    %v143 = vpack.c.b16 %v139, %v138
    %vm148 = vcmask 523264
    %v150 = vsel %vm148, %v117, 0
    %152 = vmatprep.subr.bf16.mxu0 0
    %153 = vmatpush1.bf16.msra.mxu0 0
    %154 = vmatprep.subr.bf16.mxu0 0
    %155 = vmatpush1.bf16.msra.mxu0 0
    %156 = vmatprep.subr.bf16.mxu0 0
    %157 = vmatpush1.bf16.msra.mxu0 0
    %158 = vmatprep.subr.bf16.mxu0 0
    %159 = vmatpush1.bf16.msra.mxu0 0
    %160 = vmatprep.subr.bf16.mxu0 0
    %161 = vmatpush1.bf16.msra.mxu0 %v143
    %162 = vmatprep.subr.bf16.mxu0 0
    %163 = vmatpush1.bf16.msra.mxu0 %v142
    %164 = vmatprep.subr.bf16.mxu0 0
    %165 = vmatpush1.bf16.msra.mxu0 %v141
    %166 = vmatprep.subr.bf16.mxu0 0
    %167 = vmatpush1.bf16.msra.mxu0 %v140
    %168 = vmatprep.subr.bf16.mxu0 0
    %169 = vmatpush2.bf16.msra.mxu0 0
    %170 = vmatprep.subr.bf16.mxu0 0
    %171 = vmatpush2.bf16.msra.mxu0 0
    %172 = vmatprep.subr.bf16.mxu0 0
    %173 = vmatpush2.bf16.msra.mxu0 0
    %174 = vmatprep.subr.bf16.mxu0 0
    %175 = vmatpush2.bf16.msra.mxu0 0
    %176 = vmatprep.subr.bf16.mxu0 0
    %177 = vmatpush2.bf16.msra.mxu0 0
    %178 = vmatprep.subr.bf16.mxu0 0
    %179 = vmatpush2.bf16.msra.mxu0 0
    %180 = vmatprep.subr.bf16.mxu0 0
    %181 = vmatpush2.bf16.msra.mxu0 0
    %182 = vmatprep.subr.bf16.mxu0 0
    %183 = vmatpush2.bf16.msra.mxu0 0
    %184 = vmatprep.mubr.bf16.mxu0 0
    %185 = vmatmul.mubr.bf16.gmra.mxu0 %v150
    %v186 = vpop.f32.mrf.mxu0
    %v187 = vadd.f32 %v122, %v186
    %v188 = vpop.f32.mrf.mxu0
    %v189 = vpop.f32.mrf.mxu0
    %v190 = vpop.f32.mrf.mxu0
    %191 = vdwg.mxu0
    %vm192 = vcmp.gt.f32.partialorder %v187, 0.0
    %v193 = vmul.f32 %v187, 0.2
    %v194 = vsel %vm192, %v187, %v193
    %v195 = vpack.c.bf16 %v194, %v194
    %v197 = vlaneseq
    %v198 = vshrl.u32 %v197, 7
    %v199 = vsub.s32 0, %v198
    %v200 = vrot.slane %v67, %v199
    %v218 = vunpack.c.l.b16 %v51
    %v219 = vunpack.c.l.b16 %v52
    %v220 = vunpack.c.l.b16 %v53
    %v221 = vunpack.c.l.b16 %v54
    %v222 = vunpack.c.l.b16 %v55
    %v223 = vunpack.c.l.b16 %v56
    %v224 = vunpack.c.l.b16 %v57
    %v225 = vunpack.c.l.b16 %v58
    %v226 = vunpack.c.l.b16 %v59
    %v227 = vunpack.c.l.b16 %v60
    %v228 = vunpack.c.l.b16 %v61
    %v229 = vunpack.c.l.b16 %v62
    %v230 = vunpack.c.l.b16 %v63
    %v231 = vunpack.c.l.b16 %v64
    %v232 = vunpack.c.l.b16 %v65
    %v233 = vunpack.c.l.b16 %v66
    %v234 = vpack.c.b16 %v219, %v218
    %v235 = vpack.c.b16 %v221, %v220
    %v236 = vpack.c.b16 %v223, %v222
    %v237 = vpack.c.b16 %v225, %v224
    %v238 = vpack.c.b16 %v227, %v226
    %v239 = vpack.c.b16 %v229, %v228
    %v240 = vpack.c.b16 %v231, %v230
    %v241 = vpack.c.b16 %v233, %v232
    %250 = vmatprep.subr.bf16.mxu0 0
    %251 = vmatpush1.bf16.msra.mxu0 %v241
    %252 = vmatprep.subr.bf16.mxu0 0
    %253 = vmatpush1.bf16.msra.mxu0 %v240
    %254 = vmatprep.subr.bf16.mxu0 0
    %255 = vmatpush1.bf16.msra.mxu0 %v239
    %256 = vmatprep.subr.bf16.mxu0 0
    %257 = vmatpush1.bf16.msra.mxu0 %v238
    %258 = vmatprep.subr.bf16.mxu0 0
    %259 = vmatpush1.bf16.msra.mxu0 %v237
    %260 = vmatprep.subr.bf16.mxu0 0
    %261 = vmatpush1.bf16.msra.mxu0 %v236
    %262 = vmatprep.subr.bf16.mxu0 0
    %263 = vmatpush1.bf16.msra.mxu0 %v235
    %264 = vmatprep.subr.bf16.mxu0 0
    %265 = vmatpush1.bf16.msra.mxu0 %v234
    %266 = vmatprep.subr.bf16.mxu0 0
    %267 = vmatpush2.bf16.msra.mxu0 0
    %268 = vmatprep.subr.bf16.mxu0 0
    %269 = vmatpush2.bf16.msra.mxu0 0
    %270 = vmatprep.subr.bf16.mxu0 0
    %271 = vmatpush2.bf16.msra.mxu0 0
    %272 = vmatprep.subr.bf16.mxu0 0
    %273 = vmatpush2.bf16.msra.mxu0 0
    %274 = vmatprep.subr.bf16.mxu0 0
    %275 = vmatpush2.bf16.msra.mxu0 0
    %276 = vmatprep.subr.bf16.mxu0 0
    %277 = vmatpush2.bf16.msra.mxu0 0
    %278 = vmatprep.subr.bf16.mxu0 0
    %279 = vmatpush2.bf16.msra.mxu0 0
    %280 = vmatprep.subr.bf16.mxu0 0
    %281 = vmatpush2.bf16.msra.mxu0 0
    %282 = vmatprep.mubr.bf16.mxu0 0
    %283 = vmatmul.mubr.bf16.gmra.mxu0 %v195
    %v284 = vpop.f32.mrf.mxu0
    %v285 = vadd.f32 %v200, %v284
    %v286 = vpop.f32.mrf.mxu0
    %v287 = vpop.f32.mrf.mxu0
    %v288 = vpop.f32.mrf.mxu0
    %289 = vdwg.mxu0
    %vm290 = vcmp.gt.f32.partialorder %v285, 0.0
    %v291 = vmul.f32 %v285, 0.2
    %v292 = vsel %vm290, %v285, %v291
    %v293 = vpack.c.bf16 %v292, %v292
    %v295 = vlaneseq
    %v296 = vshrl.u32 %v295, 7
    %v297 = vsub.s32 0, %v296
    %v298 = vrot.slane %v84, %v297
    %v316 = vunpack.c.l.b16 %v68
    %v317 = vunpack.c.l.b16 %v69
    %v318 = vunpack.c.l.b16 %v70
    %v319 = vunpack.c.l.b16 %v71
    %v320 = vunpack.c.l.b16 %v72
    %v321 = vunpack.c.l.b16 %v73
    %v322 = vunpack.c.l.b16 %v74
    %v323 = vunpack.c.l.b16 %v75
    %v324 = vunpack.c.l.b16 %v76
    %v325 = vunpack.c.l.b16 %v77
    %v326 = vunpack.c.l.b16 %v78
    %v327 = vunpack.c.l.b16 %v79
    %v328 = vunpack.c.l.b16 %v80
    %v329 = vunpack.c.l.b16 %v81
    %v330 = vunpack.c.l.b16 %v82
    %v331 = vunpack.c.l.b16 %v83
    %v332 = vpack.c.b16 %v317, %v316
    %v333 = vpack.c.b16 %v319, %v318
    %v334 = vpack.c.b16 %v321, %v320
    %v335 = vpack.c.b16 %v323, %v322
    %v336 = vpack.c.b16 %v325, %v324
    %v337 = vpack.c.b16 %v327, %v326
    %v338 = vpack.c.b16 %v329, %v328
    %v339 = vpack.c.b16 %v331, %v330
    %348 = vmatprep.subr.bf16.mxu0 0
    %349 = vmatpush1.bf16.msra.mxu0 %v339
    %350 = vmatprep.subr.bf16.mxu0 0
    %351 = vmatpush1.bf16.msra.mxu0 %v338
    %352 = vmatprep.subr.bf16.mxu0 0
    %353 = vmatpush1.bf16.msra.mxu0 %v337
    %354 = vmatprep.subr.bf16.mxu0 0
    %355 = vmatpush1.bf16.msra.mxu0 %v336
    %356 = vmatprep.subr.bf16.mxu0 0
    %357 = vmatpush1.bf16.msra.mxu0 %v335
    %358 = vmatprep.subr.bf16.mxu0 0
    %359 = vmatpush1.bf16.msra.mxu0 %v334
    %360 = vmatprep.subr.bf16.mxu0 0
    %361 = vmatpush1.bf16.msra.mxu0 %v333
    %362 = vmatprep.subr.bf16.mxu0 0
    %363 = vmatpush1.bf16.msra.mxu0 %v332
    %364 = vmatprep.subr.bf16.mxu0 0
    %365 = vmatpush2.bf16.msra.mxu0 0
    %366 = vmatprep.subr.bf16.mxu0 0
    %367 = vmatpush2.bf16.msra.mxu0 0
    %368 = vmatprep.subr.bf16.mxu0 0
    %369 = vmatpush2.bf16.msra.mxu0 0
    %370 = vmatprep.subr.bf16.mxu0 0
    %371 = vmatpush2.bf16.msra.mxu0 0
    %372 = vmatprep.subr.bf16.mxu0 0
    %373 = vmatpush2.bf16.msra.mxu0 0
    %374 = vmatprep.subr.bf16.mxu0 0
    %375 = vmatpush2.bf16.msra.mxu0 0
    %376 = vmatprep.subr.bf16.mxu0 0
    %377 = vmatpush2.bf16.msra.mxu0 0
    %378 = vmatprep.subr.bf16.mxu0 0
    %379 = vmatpush2.bf16.msra.mxu0 0
    %380 = vmatprep.mubr.bf16.mxu0 0
    %381 = vmatmul.mubr.bf16.gmra.mxu0 %v293
    %v382 = vpop.f32.mrf.mxu0
    %v383 = vadd.f32 %v298, %v382
    %v384 = vpop.f32.mrf.mxu0
    %v385 = vpop.f32.mrf.mxu0
    %v386 = vpop.f32.mrf.mxu0
    %387 = vdwg.mxu0
    %vm388 = vcmp.gt.f32.partialorder %v383, 0.0
    %v389 = vmul.f32 %v383, 0.2
    %v390 = vsel %vm388, %v383, %v389
    %v391 = vpack.c.bf16 %v390, %v390
    %v393 = vlaneseq
    %v394 = vshrl.u32 %v393, 7
    %v395 = vsub.s32 0, %v394
    %v396 = vrot.slane %v93, %v395
    %v406 = vunpack.c.l.b16 %v85
    %v407 = vunpack.c.l.b16 %v86
    %v408 = vunpack.c.l.b16 %v87
    %v409 = vunpack.c.l.b16 %v88
    %v410 = vunpack.c.l.b16 %v89
    %v411 = vunpack.c.l.b16 %v90
    %v412 = vunpack.c.l.b16 %v91
    %v413 = vunpack.c.l.b16 %v92
    %v414 = vpack.c.b16 %v407, %v406
    %v415 = vpack.c.b16 %v409, %v408
    %v416 = vpack.c.b16 %v411, %v410
    %v417 = vpack.c.b16 %v413, %v412
    %v423 = vsel %vm148, %v391, 0
    %425 = vmatprep.subr.bf16.mxu0 0
    %426 = vmatpush1.bf16.msra.mxu0 0
    %427 = vmatprep.subr.bf16.mxu0 0
    %428 = vmatpush1.bf16.msra.mxu0 0
    %429 = vmatprep.subr.bf16.mxu0 0
    %430 = vmatpush1.bf16.msra.mxu0 0
    %431 = vmatprep.subr.bf16.mxu0 0
    %432 = vmatpush1.bf16.msra.mxu0 0
    %433 = vmatprep.subr.bf16.mxu0 0
    %434 = vmatpush1.bf16.msra.mxu0 %v417
    %435 = vmatprep.subr.bf16.mxu0 0
    %436 = vmatpush1.bf16.msra.mxu0 %v416
    %437 = vmatprep.subr.bf16.mxu0 0
    %438 = vmatpush1.bf16.msra.mxu0 %v415
    %439 = vmatprep.subr.bf16.mxu0 0
    %440 = vmatpush1.bf16.msra.mxu0 %v414
    %441 = vmatprep.subr.bf16.mxu0 0
    %442 = vmatpush2.bf16.msra.mxu0 0
    %443 = vmatprep.subr.bf16.mxu0 0
    %444 = vmatpush2.bf16.msra.mxu0 0
    %445 = vmatprep.subr.bf16.mxu0 0
    %446 = vmatpush2.bf16.msra.mxu0 0
    %447 = vmatprep.subr.bf16.mxu0 0
    %448 = vmatpush2.bf16.msra.mxu0 0
    %449 = vmatprep.subr.bf16.mxu0 0
    %450 = vmatpush2.bf16.msra.mxu0 0
    %451 = vmatprep.subr.bf16.mxu0 0
    %452 = vmatpush2.bf16.msra.mxu0 0
    %453 = vmatprep.subr.bf16.mxu0 0
    %454 = vmatpush2.bf16.msra.mxu0 0
    %455 = vmatprep.subr.bf16.mxu0 0
    %456 = vmatpush2.bf16.msra.mxu0 0
    %457 = vmatprep.mubr.bf16.mxu0 0
    %458 = vmatmul.mubr.bf16.gmra.mxu0 %v423
    %v459 = vpop.f32.mrf.mxu0
    %v460 = vadd.f32 %v396, %v459
    %v461 = vpop.f32.mrf.mxu0
    %v462 = vpop.f32.mrf.mxu0
    %v463 = vpop.f32.mrf.mxu0
    %464 = vdwg.mxu0
    %vm465 = vcmask 64512
    %v466 = vsel %vm465, %v460, -inf
    %467 = vmax.xlane.f32.xlu0 %v466
    %v468 = vpop.xlane.xlu0 %467
    %v469 = vsub.f32 %v460, %v468
    %v470 = vmul.f32 %v469, 1.442695
    %v471 = vpow.pop %v470
    %v472 = vsel %vm465, %v471, 0.0
    %473 = vadd.xlane.f32.xlu0 %v472
    %v474 = vpop.xlane.xlu0 %473
    %v475 = vrcp.pop %v474
    %v476 = vmul.f32 %v471, %v475
    %477 = vst.msk [vmem:[#allocation2] sm:$0xff] %vm465, %v476
    // Predicated region
    $region46: #{attention_net_forward.1} parent=1 // pred_check
      _
    $region47: #{attention_net_forward.1} parent=1 // pred_check_branch
      %479 = sbr.rel (0) target = $region49
    $region48: #{attention_net_forward.1} parent=1 // pred_region
      %s481 = ssub.s32 128, 128
      %482 = vsyncadd [#allocation3], %s481
      %s484 = sshll.u32 [#allocation2], 4
      %s485 = int_to_ptr.vmem [resolvable:$true] %s484
      %487 = dma.vmem_to_hbm [thread:$0]  %s485, 128, %s11, [#allocation3]
    $region49: #{attention_net_forward.1} parent=1 // pred_fallthru
      _
    // Predicated region
    $region50: #{attention_net_forward.1} parent=1 // pred_check
      _
    $region51: #{attention_net_forward.1} parent=1 // pred_check_branch
      %489 = sbr.rel (0) target = $region53
    $region52: #{attention_net_forward.1} parent=1 // pred_region
      %490 = dma.done [#allocation3], 128
    $region53: #{attention_net_forward.1} parent=1 // pred_fallthru
      _
    %491 = vsyncpa [#allocation3], 1

</llo_original>
